<compile_context>
chip_gen: v5e
topology: v5e:2x2
jax: 0.10.0
libtpu: 0.0.40
codegen_flags: <defaults>
</compile_context>

<pallas_src>
import jax
import jax.numpy as jnp
from jax import lax
from jax.experimental import pallas as pl
from jax.experimental.pallas import tpu as pltpu

INPUT_NC = 1
NDF = 64
C2 = 2 * NDF          # 128 channels after conv2 (one full lane/sublane group)
EPS = 1e-3            # BatchNorm2d branch of __init__
NEG_SLOPE = 0.2
MAX_TP = 4096         # pixels (lanes) per grid step


def _leaky_relu(x):
    return jnp.where(x >= 0, x, NEG_SLOPE * x)


def _ceil_to(x, m):
    return ((x + m - 1) // m) * m


# ---------------------------------------------------------------------------
# Pass 1: per-channel sum / sum-of-squares of h2 over the true pixels.
# Layout: channels on sublanes, pixels on lanes.
#   x_ref   : (1, TP)       pixel values of this tile
#   w1_ref  : (NDF, 1)      conv1 weight (Cout, Cin=1)
#   b1_ref  : (NDF, 1)      conv1 bias
#   w2t_ref : (C2, NDF)     conv2 weight (Cout, Cin)
#   sums_ref: (C2, 2)       [:,0]=sum(h2), [:,1]=sum(h2^2)   (resident accumulator)
# ---------------------------------------------------------------------------
def _make_stats_kernel(tp, n_pix):
    def stats_kernel(x_ref, w1_ref, b1_ref, w2t_ref, sums_ref):
        i = pl.program_id(0)

        @pl.when(i == 0)
        def _init():
            sums_ref[...] = jnp.zeros_like(sums_ref)

        x = x_ref[...]                                             # (1, TP)
        h1 = _leaky_relu(x * w1_ref[...] + b1_ref[...])            # (NDF, TP)
        h2 = jnp.dot(w2t_ref[...], h1,
                     preferred_element_type=jnp.float32)           # (C2, TP)

        # Mask out padded pixels so BN statistics match PyTorch exactly.
        lane = lax.broadcasted_iota(jnp.int32, (1, tp), 1)
        mask = (i * tp + lane) < n_pix                             # (1, TP)
        h2m = jnp.where(mask, h2, 0.0)

        sums_ref[:, 0:1] += jnp.sum(h2m, axis=1, keepdims=True)
        sums_ref[:, 1:2] += jnp.sum(h2m * h2m, axis=1, keepdims=True)

    return stats_kernel


# ---------------------------------------------------------------------------
# Pass 2: recompute layers 1-2 per tile, apply folded BN (one FMA), LeakyReLU,
# and the conv3 channel reduction. Output is a lane-dense (1, TP) row.
# ---------------------------------------------------------------------------
def main_kernel(x_ref, w1_ref, b1_ref, w2t_ref, scale_ref, shift_ref, w3_ref,
                o_ref):
    x = x_ref[...]                                                 # (1, TP)
    h1 = _leaky_relu(x * w1_ref[...] + b1_ref[...])                # (NDF, TP)
    h2 = jnp.dot(w2t_ref[...], h1,
                 preferred_element_type=jnp.float32)               # (C2, TP)
    h3 = _leaky_relu(h2 * scale_ref[...] + shift_ref[...])         # (C2, TP)
    # conv3: 1 output channel -> per-pixel reduction over channels (sublanes).
    o_ref[...] = jnp.sum(h3 * w3_ref[...], axis=0, keepdims=True)  # (1, TP)


def init_params(key):
    """Parameters in PyTorch-native (Cout, Cin) orientation."""
    k1, k2, k3, k4 = jax.random.split(key, 4)
    w1 = jax.random.normal(k1, (NDF, INPUT_NC), jnp.float32) * 0.1
    b1 = jax.random.normal(k2, (NDF,), jnp.float32) * 0.1
    w2 = jax.random.normal(k3, (C2, NDF), jnp.float32) * 0.1
    gamma = jnp.ones((C2,), jnp.float32)   # BatchNorm affine defaults
    beta = jnp.zeros((C2,), jnp.float32)
    w3 = jax.random.normal(k4, (1, C2), jnp.float32) * 0.1
    return w1, b1, w2, gamma, beta, w3


def pixel_discriminator(x_nchw, params):
    w1, b1, w2, gamma, beta, w3 = params
    N, C, H, W = x_nchw.shape
    assert C == INPUT_NC == 1, "kernel specialized for input_nc=1"
    P = N * H * W

    tp = min(MAX_TP, _ceil_to(P, 128))
    p_pad = _ceil_to(P, tp)
    nt = p_pad // tp

    # C=1: plain reshape is layout-equivalent to NCHW->NHWC; pixels -> lanes.
    x_row = x_nchw.astype(jnp.float32).reshape(1, P)
    if p_pad != P:
        x_row = jnp.pad(x_row, ((0, 0), (0, p_pad - P)))

    w1_col = w1.reshape(NDF, 1)
    b1_col = b1.reshape(NDF, 1)
    w2t = w2.reshape(C2, NDF)
    w3_col = w3.reshape(C2, 1)

    # ---- Pass 1: BN statistics over all N*H*W pixels --------------------
    sums = pl.pallas_call(
        _make_stats_kernel(tp, P),
        out_shape=jax.ShapeDtypeStruct((C2, 2), jnp.float32),
        grid=(nt,),
        in_specs=[
            pl.BlockSpec((1, tp), lambda i: (0, i)),
            pl.BlockSpec((NDF, 1), lambda i: (0, 0)),
            pl.BlockSpec((NDF, 1), lambda i: (0, 0)),
            pl.BlockSpec((C2, NDF), lambda i: (0, 0)),
        ],
        out_specs=pl.BlockSpec((C2, 2), lambda i: (0, 0)),
        compiler_params=pltpu.CompilerParams(
            dimension_semantics=("arbitrary",)),
    )(x_row, w1_col, b1_col, w2t)

    # ---- Fold BN into one FMA (tiny, done in plain JAX) ------------------
    mean = sums[:, 0] / P
    var = sums[:, 1] / P - mean * mean          # biased variance (training BN)
    scale = gamma * lax.rsqrt(var + EPS)
    shift = beta - mean * scale
    scale = scale.reshape(C2, 1)
    shift = shift.reshape(C2, 1)

    # ---- Pass 2: normalize + activation + conv3, lane-dense output -------
    y = pl.pallas_call(
        main_kernel,
        out_shape=jax.ShapeDtypeStruct((1, p_pad), jnp.float32),
        grid=(nt,),
        in_specs=[
            pl.BlockSpec((1, tp), lambda i: (0, i)),
            pl.BlockSpec((NDF, 1), lambda i: (0, 0)),
            pl.BlockSpec((NDF, 1), lambda i: (0, 0)),
            pl.BlockSpec((C2, NDF), lambda i: (0, 0)),
            pl.BlockSpec((C2, 1), lambda i: (0, 0)),
            pl.BlockSpec((C2, 1), lambda i: (0, 0)),
            pl.BlockSpec((C2, 1), lambda i: (0, 0)),
        ],
        out_specs=pl.BlockSpec((1, tp), lambda i: (0, i)),
        compiler_params=pltpu.CompilerParams(
            dimension_semantics=("parallel",)),
    )(x_row, w1_col, b1_col, w2t, scale, shift, w3_col)

    # C_out = 1: plain reshape back to NCHW.
    return y[0, :P].reshape(N, 1, H, W)


def pixel_discriminator_ref(x_nchw, params):
    """Pure-JAX reference mirroring the PyTorch forward (training-mode BN)."""
    w1, b1, w2, gamma, beta, w3 = params
    N, C, H, W = x_nchw.shape
    x = x_nchw.astype(jnp.float32).transpose(0, 2, 3, 1).reshape(N * H * W, C)
    h1 = _leaky_relu(x @ w1.T + b1.reshape(1, -1))
    h2 = h1 @ w2.T
    mean = jnp.mean(h2, axis=0, keepdims=True)
    var = jnp.mean((h2 - mean) ** 2, axis=0, keepdims=True)
    h3 = _leaky_relu((h2 - mean) * lax.rsqrt(var + EPS) * gamma.reshape(1, -1)
                     + beta.reshape(1, -1))
    y = h3 @ w3.reshape(1, -1).T
    return y.reshape(N, H, W, 1).transpose(0, 3, 1, 2)


if __name__ == "__main__":
    key = jax.random.PRNGKey(0)
    kx, kp = jax.random.split(key)
    # input_nc = 1 (module default): x is (batch=2, C=1, H=16, W=16), NCHW.
    x = jax.random.normal(kx, (2, INPUT_NC, 16, 16), jnp.float32)
    params = init_params(kp)

    y = pixel_discriminator(x, params)
    y = jax.block_until_ready(y)

    y_ref = pixel_discriminator_ref(x, params)
    assert y.shape == (2, 1, 16, 16), y.shape
    assert jnp.allclose(y, y_ref, atol=1e-4, rtol=1e-4), (
        float(jnp.max(jnp.abs(y - y_ref))))
    print("KERNEL_OK")
</pallas_src>

<mosaic_0001>
module attributes {stable_mosaic.version = 11 : i64} {
  func.func @stats_kernel(%arg0: i32, %arg1: memref<1x512xf32, #tpu.memory_space<vmem>>, %arg2: memref<64x1xf32, #tpu.memory_space<vmem>>, %arg3: memref<64x1xf32, #tpu.memory_space<vmem>>, %arg4: memref<128x64xf32, #tpu.memory_space<vmem>>, %arg5: memref<128x2xf32, #tpu.memory_space<vmem>>) attributes {dimension_semantics = [#tpu.dimension_semantics<arbitrary>], iteration_bounds = array<i64: 1>, scalar_prefetch = 0 : i64, scratch_operands = 0 : i64, tpu.core_type = #tpu.core_type<tc>, window_params = [{transform_indices = @transform_0, window_bounds = array<i64: 1, 512>}, {pipeline_mode = #tpu.pipeline_mode<synchronous>, transform_indices = @transform_1, window_bounds = array<i64: 64, 1>}, {pipeline_mode = #tpu.pipeline_mode<synchronous>, transform_indices = @transform_2, window_bounds = array<i64: 64, 1>}, {pipeline_mode = #tpu.pipeline_mode<synchronous>, transform_indices = @transform_3, window_bounds = array<i64: 128, 64>}, {pipeline_mode = #tpu.pipeline_mode<synchronous>, transform_indices = @transform_4, window_bounds = array<i64: 128, 2>}]} {
    %c0_i32 = arith.constant 0 : i32
    %0 = arith.cmpi eq, %arg0, %c0_i32 : i32
    %1 = arith.extui %0 : i1 to i32
    %c0_i32_0 = arith.constant 0 : i32
    %2 = arith.cmpi ne, %1, %c0_i32_0 : i32
    scf.if %2 {
      %cst_21 = arith.constant 0.000000e+00 : f32
      %39 = vector.broadcast %cst_21 : f32 to vector<128x2xf32>
      %c0_22 = arith.constant 0 : index
      %c0_23 = arith.constant 0 : index
      %40 = vector.load %arg5[%c0_22, %c0_23] : memref<128x2xf32, #tpu.memory_space<vmem>>, vector<128x2xf32>
      tpu.vector_store %arg5[%c0_22, %c0_23], %39 {strides = array<i32>} : memref<128x2xf32, #tpu.memory_space<vmem>>, vector<128x2xf32>,
    } else {
    }
    %c0 = arith.constant 0 : index
    %c0_1 = arith.constant 0 : index
    %3 = vector.load %arg1[%c0, %c0_1] : memref<1x512xf32, #tpu.memory_space<vmem>>, vector<1x512xf32>
    %c0_2 = arith.constant 0 : index
    %c0_3 = arith.constant 0 : index
    %4 = vector.load %arg2[%c0_2, %c0_3] : memref<64x1xf32, #tpu.memory_space<vmem>>, vector<64x1xf32>
    %5 = vector.broadcast %3 : vector<1x512xf32> to vector<64x512xf32>
    %6 = vector.broadcast %4 : vector<64x1xf32> to vector<64x512xf32>
    %7 = arith.mulf %5, %6 : vector<64x512xf32>
    %c0_4 = arith.constant 0 : index
    %c0_5 = arith.constant 0 : index
    %8 = vector.load %arg3[%c0_4, %c0_5] : memref<64x1xf32, #tpu.memory_space<vmem>>, vector<64x1xf32>
    %9 = vector.broadcast %8 : vector<64x1xf32> to vector<64x512xf32>
    %10 = arith.addf %7, %9 : vector<64x512xf32>
    %cst = arith.constant 0.000000e+00 : f32
    %11 = vector.broadcast %cst : f32 to vector<64x512xf32>
    %12 = arith.cmpf oge, %10, %11 : vector<64x512xf32>
    %cst_6 = arith.constant 2.000000e-01 : f32
    %13 = vector.broadcast %cst_6 : f32 to vector<64x512xf32>
    %14 = arith.mulf %13, %10 : vector<64x512xf32>
    %15 = arith.select %12, %10, %14 : vector<64x512xi1>, vector<64x512xf32>
    %c0_7 = arith.constant 0 : index
    %c0_8 = arith.constant 0 : index
    %16 = vector.load %arg4[%c0_7, %c0_8] : memref<128x64xf32, #tpu.memory_space<vmem>>, vector<128x64xf32>
    %cst_9 = arith.constant dense<0.000000e+00> : vector<128x512xf32>
    %17 = tpu.matmul %16, %15, %cst_9 {dimension_numbers = #tpu.dot_dimension_numbers<[1], [0], [0], [1], [0, 0, 1, 1], [], []>} : vector<128x64xf32>, vector<64x512xf32>, vector<128x512xf32> -> vector<128x512xf32>
    %18 = tpu.iota {dimensions = array<i32: 1>} : vector<1x512xi32>
    %c512_i32 = arith.constant 512 : i32
    %19 = arith.muli %arg0, %c512_i32 : i32
    %20 = vector.broadcast %19 : i32 to vector<1x512xi32>
    %21 = arith.addi %20, %18 : vector<1x512xi32>
    %c512_i32_10 = arith.constant 512 : i32
    %22 = vector.broadcast %c512_i32_10 : i32 to vector<1x512xi32>
    %23 = arith.cmpi slt, %21, %22 : vector<1x512xi32>
    %cst_11 = arith.constant 0.000000e+00 : f32
    %24 = vector.shape_cast %23 : vector<1x512xi1> to vector<1x512xi1>
    %25 = vector.broadcast %24 : vector<1x512xi1> to vector<128x512xi1>
    %26 = vector.broadcast %cst_11 : f32 to vector<128x512xf32>
    %27 = arith.select %25, %17, %26 : vector<128x512xi1>, vector<128x512xf32>
    %c0_12 = arith.constant 0 : index
    %c0_13 = arith.constant 0 : index
    %28 = vector.load %arg5[%c0_12, %c0_13] : memref<128x2xf32, #tpu.memory_space<vmem>>, vector<128x1xf32>
    %cst_14 = arith.constant dense<0.000000e+00> : vector<128xf32>
    %29 = vector.multi_reduction <add>, %27, %cst_14 [1] : vector<128x512xf32> to vector<128xf32>
    %30 = vector.shape_cast %29 : vector<128xf32> to vector<128x1xf32>
    %31 = arith.addf %28, %30 : vector<128x1xf32>
    %c0_15 = arith.constant 0 : index
    %c0_16 = arith.constant 0 : index
    %32 = vector.load %arg5[%c0_15, %c0_16] : memref<128x2xf32, #tpu.memory_space<vmem>>, vector<128x1xf32>
    tpu.vector_store %arg5[%c0_15, %c0_16], %31 {strides = array<i32>} : memref<128x2xf32, #tpu.memory_space<vmem>>, vector<128x1xf32>,
    %c0_17 = arith.constant 0 : index
    %c1 = arith.constant 1 : index
    %33 = vector.load %arg5[%c0_17, %c1] : memref<128x2xf32, #tpu.memory_space<vmem>>, vector<128x1xf32>
    %34 = arith.mulf %27, %27 : vector<128x512xf32>
    %cst_18 = arith.constant dense<0.000000e+00> : vector<128xf32>
    %35 = vector.multi_reduction <add>, %34, %cst_18 [1] : vector<128x512xf32> to vector<128xf32>
    %36 = vector.shape_cast %35 : vector<128xf32> to vector<128x1xf32>
    %37 = arith.addf %33, %36 : vector<128x1xf32>
    %c0_19 = arith.constant 0 : index
    %c1_20 = arith.constant 1 : index
    %38 = vector.load %arg5[%c0_19, %c1_20] : memref<128x2xf32, #tpu.memory_space<vmem>>, vector<128x1xf32>
    tpu.vector_store %arg5[%c0_19, %c1_20], %37 {strides = array<i32>} : memref<128x2xf32, #tpu.memory_space<vmem>>, vector<128x1xf32>,
    return
  }
  func.func @transform_0(%arg0: i32) -> (i32, i32) {
    %c0_i32 = arith.constant 0 : i32
    %c0_i32_0 = arith.constant 0 : i32
    return %c0_i32, %arg0 : i32, i32
  }
  func.func @transform_1(%arg0: i32) -> (i32, i32) {
    %c0_i32 = arith.constant 0 : i32
    %c0_i32_0 = arith.constant 0 : i32
    %c0_i32_1 = arith.constant 0 : i32
    return %c0_i32, %c0_i32_0 : i32, i32
  }
  func.func @transform_2(%arg0: i32) -> (i32, i32) {
    %c0_i32 = arith.constant 0 : i32
    %c0_i32_0 = arith.constant 0 : i32
    %c0_i32_1 = arith.constant 0 : i32
    return %c0_i32, %c0_i32_0 : i32, i32
  }
  func.func @transform_3(%arg0: i32) -> (i32, i32) {
    %c0_i32 = arith.constant 0 : i32
    %c0_i32_0 = arith.constant 0 : i32
    %c0_i32_1 = arith.constant 0 : i32
    return %c0_i32, %c0_i32_0 : i32, i32
  }
  func.func @transform_4(%arg0: i32) -> (i32, i32) {
    %c0_i32 = arith.constant 0 : i32
    %c0_i32_0 = arith.constant 0 : i32
    %c0_i32_1 = arith.constant 0 : i32
    return %c0_i32, %c0_i32_0 : i32, i32
  }
}

</mosaic_0001>

<llo_original>
// kernel: tpu_custom_call.1
$region0: #{tpu_custom_call.1}
  #allocation0 [shape = 'u32[]', space=smem, size = 0x4, offset = 0x4, fixed_abs, tag = 'smem constant byte address 0x4 - core index']
  #allocation1 [shape = 'u32[72,128]{1,0:T(1,128)}', space=vmem, size = 0x9000, scoped, tag = 'internal scratch']
  %s0 = inlined_call_operand.vmem [shape: f32[1,512], index: 0, kind: input, shape index: {}]
  %s1 = inlined_call_operand.vmem [shape: f32[64,1], index: 1, kind: input, shape index: {}]
  %s2 = inlined_call_operand.vmem [shape: f32[64,1], index: 2, kind: input, shape index: {}]
  %s3 = inlined_call_operand.vmem [shape: f32[128,64], index: 3, kind: input, shape index: {}]
  %s4 = inlined_call_operand.vmem [shape: f32[128,2], index: 4, kind: output, shape index: {}]
  %s5 = sld [smem:[#allocation0]]
  $region30: #{tpu_custom_call.1} parent=0
    _
  %s7 = ssub.s32 1, %s5
  %s8 = scalar_select 0, %s7, %s5
  // Predicated region
  $region2: #{tpu_custom_call.1} parent=0 // pred_check
    _
  $region3: #{tpu_custom_call.1} parent=0 // pred_check_branch
    %10 = sbr.rel (0) target = $region5
  $region4: #{tpu_custom_call.1} parent=0 // pred_region
    _
  $region5: #{tpu_custom_call.1} parent=0 // pred_fallthru
    _
  // Predicated region
  $region6: #{tpu_custom_call.1} parent=0 // pred_check
    _
  $region7: #{tpu_custom_call.1} parent=0 // pred_check_branch
    %12 = sbr.rel (0) target = $region9
  $region8: #{tpu_custom_call.1} parent=0 // pred_region
    _
  $region9: #{tpu_custom_call.1} parent=0 // pred_fallthru
    _
  // Predicated region
  $region10: #{tpu_custom_call.1} parent=0 // pred_check
    _
  $region11: #{tpu_custom_call.1} parent=0 // pred_check_branch
    %14 = sbr.rel (0) target = $region13
  $region12: #{tpu_custom_call.1} parent=0 // pred_region
    _
  $region13: #{tpu_custom_call.1} parent=0 // pred_fallthru
    _
  // Predicated region
  $region14: #{tpu_custom_call.1} parent=0 // pred_check
    _
  $region15: #{tpu_custom_call.1} parent=0 // pred_check_branch
    %16 = sbr.rel (0) target = $region17
  $region16: #{tpu_custom_call.1} parent=0 // pred_region
    _
  $region17: #{tpu_custom_call.1} parent=0 // pred_fallthru
    _
  %p17 = scmp.eq.s32.totalorder 0, 0
  // Predicated region
  $region18: #{tpu_custom_call.1} parent=0 // pred_check
    %p18 = pneg %p17
  $region19: #{tpu_custom_call.1} parent=0 // pred_check_branch
    %20 = sbr.rel (%p18) target = $region21
  $region20: #{tpu_custom_call.1} parent=0 // pred_region
    %vm21 = vcmask 15360
    %22 = vst.msk [vmem:[%s4] sm:$0xff] %vm21, 0.0
    %23 = vst.msk [vmem:[%s4 + $0x8] sm:$0xff] %vm21, 0.0
    %24 = vst.msk [vmem:[%s4 + $0x10] sm:$0xff] %vm21, 0.0
    %25 = vst.msk [vmem:[%s4 + $0x18] sm:$0xff] %vm21, 0.0
    %26 = vst.msk [vmem:[%s4 + $0x20] sm:$0xff] %vm21, 0.0
    %27 = vst.msk [vmem:[%s4 + $0x28] sm:$0xff] %vm21, 0.0
    %28 = vst.msk [vmem:[%s4 + $0x30] sm:$0xff] %vm21, 0.0
    %29 = vst.msk [vmem:[%s4 + $0x38] sm:$0xff] %vm21, 0.0
    %30 = vst.msk [vmem:[%s4 + $0x40] sm:$0xff] %vm21, 0.0
    %31 = vst.msk [vmem:[%s4 + $0x48] sm:$0xff] %vm21, 0.0
    %32 = vst.msk [vmem:[%s4 + $0x50] sm:$0xff] %vm21, 0.0
    %33 = vst.msk [vmem:[%s4 + $0x58] sm:$0xff] %vm21, 0.0
    %34 = vst.msk [vmem:[%s4 + $0x60] sm:$0xff] %vm21, 0.0
    %35 = vst.msk [vmem:[%s4 + $0x68] sm:$0xff] %vm21, 0.0
    %36 = vst.msk [vmem:[%s4 + $0x70] sm:$0xff] %vm21, 0.0
    %37 = vst.msk [vmem:[%s4 + $0x78] sm:$0xff] %vm21, 0.0
  $region21: #{tpu_custom_call.1} parent=0 // pred_fallthru
    _
  %v38 = vld [vmem:[%s0] sm:$0xf]
  %v39 = vld [vmem:[%s1] sm:$0xff]
  %v40 = vld [vmem:[%s1 + $0x8] sm:$0xff]
  %v41 = vld [vmem:[%s1 + $0x10] sm:$0xff]
  %v42 = vld [vmem:[%s1 + $0x18] sm:$0xff]
  %v43 = vld [vmem:[%s1 + $0x20] sm:$0xff]
  %v44 = vld [vmem:[%s1 + $0x28] sm:$0xff]
  %v45 = vld [vmem:[%s1 + $0x30] sm:$0xff]
  %v46 = vld [vmem:[%s1 + $0x38] sm:$0xff]
  %v48 = vperm.slane %v38, 0
  %v49 = vperm.slane %v38, 1
  %v50 = vperm.slane %v38, 2
  %v51 = vperm.slane %v38, 3
  %57 = vset.pattern.permute.xlu0 0
  %58 = vperm.xlu0 %57, %v39
  %v59 = vpop.permute.xlu0 %58
  %62 = vset.pattern.permute.xlu0 0
  %63 = vperm.xlu0 %62, %v40
  %v64 = vpop.permute.xlu0 %63
  %67 = vset.pattern.permute.xlu0 0
  %68 = vperm.xlu0 %67, %v41
  %v69 = vpop.permute.xlu0 %68
  %72 = vset.pattern.permute.xlu0 0
  %73 = vperm.xlu0 %72, %v42
  %v74 = vpop.permute.xlu0 %73
  %77 = vset.pattern.permute.xlu0 0
  %78 = vperm.xlu0 %77, %v43
  %v79 = vpop.permute.xlu0 %78
  %82 = vset.pattern.permute.xlu0 0
  %83 = vperm.xlu0 %82, %v44
  %v84 = vpop.permute.xlu0 %83
  %87 = vset.pattern.permute.xlu0 0
  %88 = vperm.xlu0 %87, %v45
  %v89 = vpop.permute.xlu0 %88
  %92 = vset.pattern.permute.xlu0 0
  %93 = vperm.xlu0 %92, %v46
  %v94 = vpop.permute.xlu0 %93
  %v96 = vmul.f32 %v48, %v59
  %v97 = vmul.f32 %v49, %v59
  %v98 = vmul.f32 %v50, %v59
  %v99 = vmul.f32 %v51, %v59
  %v100 = vmul.f32 %v48, %v64
  %v101 = vmul.f32 %v49, %v64
  %v102 = vmul.f32 %v50, %v64
  %v103 = vmul.f32 %v51, %v64
  %v104 = vmul.f32 %v48, %v69
  %v105 = vmul.f32 %v49, %v69
  %v106 = vmul.f32 %v50, %v69
  %v107 = vmul.f32 %v51, %v69
  %v108 = vmul.f32 %v48, %v74
  %v109 = vmul.f32 %v49, %v74
  %v110 = vmul.f32 %v50, %v74
  %v111 = vmul.f32 %v51, %v74
  %v112 = vmul.f32 %v48, %v79
  %v113 = vmul.f32 %v49, %v79
  %v114 = vmul.f32 %v50, %v79
  %v115 = vmul.f32 %v51, %v79
  %v116 = vmul.f32 %v48, %v84
  %v117 = vmul.f32 %v49, %v84
  %v118 = vmul.f32 %v50, %v84
  %v119 = vmul.f32 %v51, %v84
  %v120 = vmul.f32 %v48, %v89
  %v121 = vmul.f32 %v49, %v89
  %v122 = vmul.f32 %v50, %v89
  %v123 = vmul.f32 %v51, %v89
  %v124 = vmul.f32 %v48, %v94
  %v125 = vmul.f32 %v49, %v94
  %v126 = vmul.f32 %v50, %v94
  %v127 = vmul.f32 %v51, %v94
  %v128 = vld [vmem:[%s2] sm:$0xff]
  %v129 = vld [vmem:[%s2 + $0x8] sm:$0xff]
  %v130 = vld [vmem:[%s2 + $0x10] sm:$0xff]
  %v131 = vld [vmem:[%s2 + $0x18] sm:$0xff]
  %v132 = vld [vmem:[%s2 + $0x20] sm:$0xff]
  %v133 = vld [vmem:[%s2 + $0x28] sm:$0xff]
  %v134 = vld [vmem:[%s2 + $0x30] sm:$0xff]
  %v135 = vld [vmem:[%s2 + $0x38] sm:$0xff]
  %137 = vset.pattern.permute.xlu0 0
  %138 = vperm.xlu0 %137, %v128
  %v139 = vpop.permute.xlu0 %138
  %142 = vset.pattern.permute.xlu0 0
  %143 = vperm.xlu0 %142, %v129
  %v144 = vpop.permute.xlu0 %143
  %147 = vset.pattern.permute.xlu0 0
  %148 = vperm.xlu0 %147, %v130
  %v149 = vpop.permute.xlu0 %148
  %152 = vset.pattern.permute.xlu0 0
  %153 = vperm.xlu0 %152, %v131
  %v154 = vpop.permute.xlu0 %153
  %157 = vset.pattern.permute.xlu0 0
  %158 = vperm.xlu0 %157, %v132
  %v159 = vpop.permute.xlu0 %158
  %162 = vset.pattern.permute.xlu0 0
  %163 = vperm.xlu0 %162, %v133
  %v164 = vpop.permute.xlu0 %163
  %167 = vset.pattern.permute.xlu0 0
  %168 = vperm.xlu0 %167, %v134
  %v169 = vpop.permute.xlu0 %168
  %172 = vset.pattern.permute.xlu0 0
  %173 = vperm.xlu0 %172, %v135
  %v174 = vpop.permute.xlu0 %173
  %v176 = vadd.f32 %v96, %v139
  %v177 = vadd.f32 %v97, %v139
  %v178 = vadd.f32 %v98, %v139
  %v179 = vadd.f32 %v99, %v139
  %v180 = vadd.f32 %v100, %v144
  %v181 = vadd.f32 %v101, %v144
  %v182 = vadd.f32 %v102, %v144
  %v183 = vadd.f32 %v103, %v144
  %v184 = vadd.f32 %v104, %v149
  %v185 = vadd.f32 %v105, %v149
  %v186 = vadd.f32 %v106, %v149
  %v187 = vadd.f32 %v107, %v149
  %v188 = vadd.f32 %v108, %v154
  %v189 = vadd.f32 %v109, %v154
  %v190 = vadd.f32 %v110, %v154
  %v191 = vadd.f32 %v111, %v154
  %v192 = vadd.f32 %v112, %v159
  %v193 = vadd.f32 %v113, %v159
  %v194 = vadd.f32 %v114, %v159
  %v195 = vadd.f32 %v115, %v159
  %v196 = vadd.f32 %v116, %v164
  %v197 = vadd.f32 %v117, %v164
  %v198 = vadd.f32 %v118, %v164
  %v199 = vadd.f32 %v119, %v164
  %v200 = vadd.f32 %v120, %v169
  %v201 = vadd.f32 %v121, %v169
  %v202 = vadd.f32 %v122, %v169
  %v203 = vadd.f32 %v123, %v169
  %v204 = vadd.f32 %v124, %v174
  %v205 = vadd.f32 %v125, %v174
  %v206 = vadd.f32 %v126, %v174
  %v207 = vadd.f32 %v127, %v174
  %vm208 = vcmp.ge.f32.partialorder %v176, 0.0
  %vm209 = vcmp.ge.f32.partialorder %v177, 0.0
  %vm210 = vcmp.ge.f32.partialorder %v178, 0.0
  %vm211 = vcmp.ge.f32.partialorder %v179, 0.0
  %vm212 = vcmp.ge.f32.partialorder %v180, 0.0
  %vm213 = vcmp.ge.f32.partialorder %v181, 0.0
  %vm214 = vcmp.ge.f32.partialorder %v182, 0.0
  %vm215 = vcmp.ge.f32.partialorder %v183, 0.0
  %vm216 = vcmp.ge.f32.partialorder %v184, 0.0
  %vm217 = vcmp.ge.f32.partialorder %v185, 0.0
  %vm218 = vcmp.ge.f32.partialorder %v186, 0.0
  %vm219 = vcmp.ge.f32.partialorder %v187, 0.0
  %vm220 = vcmp.ge.f32.partialorder %v188, 0.0
  %vm221 = vcmp.ge.f32.partialorder %v189, 0.0
  %vm222 = vcmp.ge.f32.partialorder %v190, 0.0
  %vm223 = vcmp.ge.f32.partialorder %v191, 0.0
  %vm224 = vcmp.ge.f32.partialorder %v192, 0.0
  %vm225 = vcmp.ge.f32.partialorder %v193, 0.0
  %vm226 = vcmp.ge.f32.partialorder %v194, 0.0
  %vm227 = vcmp.ge.f32.partialorder %v195, 0.0
  %vm228 = vcmp.ge.f32.partialorder %v196, 0.0
  %vm229 = vcmp.ge.f32.partialorder %v197, 0.0
  %vm230 = vcmp.ge.f32.partialorder %v198, 0.0
  %vm231 = vcmp.ge.f32.partialorder %v199, 0.0
  %vm232 = vcmp.ge.f32.partialorder %v200, 0.0
  %vm233 = vcmp.ge.f32.partialorder %v201, 0.0
  %vm234 = vcmp.ge.f32.partialorder %v202, 0.0
  %vm235 = vcmp.ge.f32.partialorder %v203, 0.0
  %vm236 = vcmp.ge.f32.partialorder %v204, 0.0
  %vm237 = vcmp.ge.f32.partialorder %v205, 0.0
  %vm238 = vcmp.ge.f32.partialorder %v206, 0.0
  %vm239 = vcmp.ge.f32.partialorder %v207, 0.0
  %v240 = vmul.f32 %v176, 0.2
  %v241 = vmul.f32 %v177, 0.2
  %v242 = vmul.f32 %v178, 0.2
  %v243 = vmul.f32 %v179, 0.2
  %v244 = vmul.f32 %v180, 0.2
  %v245 = vmul.f32 %v181, 0.2
  %v246 = vmul.f32 %v182, 0.2
  %v247 = vmul.f32 %v183, 0.2
  %v248 = vmul.f32 %v184, 0.2
  %v249 = vmul.f32 %v185, 0.2
  %v250 = vmul.f32 %v186, 0.2
  %v251 = vmul.f32 %v187, 0.2
  %v252 = vmul.f32 %v188, 0.2
  %v253 = vmul.f32 %v189, 0.2
  %v254 = vmul.f32 %v190, 0.2
  %v255 = vmul.f32 %v191, 0.2
  %v256 = vmul.f32 %v192, 0.2
  %v257 = vmul.f32 %v193, 0.2
  %v258 = vmul.f32 %v194, 0.2
  %v259 = vmul.f32 %v195, 0.2
  %v260 = vmul.f32 %v196, 0.2
  %v261 = vmul.f32 %v197, 0.2
  %v262 = vmul.f32 %v198, 0.2
  %v263 = vmul.f32 %v199, 0.2
  %v264 = vmul.f32 %v200, 0.2
  %v265 = vmul.f32 %v201, 0.2
  %v266 = vmul.f32 %v202, 0.2
  %v267 = vmul.f32 %v203, 0.2
  %v268 = vmul.f32 %v204, 0.2
  %v269 = vmul.f32 %v205, 0.2
  %v270 = vmul.f32 %v206, 0.2
  %v271 = vmul.f32 %v207, 0.2
  %v272 = vsel %vm208, %v176, %v240
  %v273 = vsel %vm209, %v177, %v241
  %v274 = vsel %vm210, %v178, %v242
  %v275 = vsel %vm211, %v179, %v243
  %v276 = vsel %vm212, %v180, %v244
  %v277 = vsel %vm213, %v181, %v245
  %v278 = vsel %vm214, %v182, %v246
  %v279 = vsel %vm215, %v183, %v247
  %v280 = vsel %vm216, %v184, %v248
  %v281 = vsel %vm217, %v185, %v249
  %v282 = vsel %vm218, %v186, %v250
  %v283 = vsel %vm219, %v187, %v251
  %v284 = vsel %vm220, %v188, %v252
  %v285 = vsel %vm221, %v189, %v253
  %v286 = vsel %vm222, %v190, %v254
  %v287 = vsel %vm223, %v191, %v255
  %v288 = vsel %vm224, %v192, %v256
  %v289 = vsel %vm225, %v193, %v257
  %v290 = vsel %vm226, %v194, %v258
  %v291 = vsel %vm227, %v195, %v259
  %v292 = vsel %vm228, %v196, %v260
  %v293 = vsel %vm229, %v197, %v261
  %v294 = vsel %vm230, %v198, %v262
  %v295 = vsel %vm231, %v199, %v263
  %v296 = vsel %vm232, %v200, %v264
  %v297 = vsel %vm233, %v201, %v265
  %v298 = vsel %vm234, %v202, %v266
  %v299 = vsel %vm235, %v203, %v267
  %v300 = vsel %vm236, %v204, %v268
  %v301 = vsel %vm237, %v205, %v269
  %v302 = vsel %vm238, %v206, %v270
  %v303 = vsel %vm239, %v207, %v271
  %v304 = vld [vmem:[%s3] sm:$0xff]
  %v305 = vld [vmem:[%s3 + $0x8] sm:$0xff]
  %v306 = vld [vmem:[%s3 + $0x10] sm:$0xff]
  %v307 = vld [vmem:[%s3 + $0x18] sm:$0xff]
  %v308 = vld [vmem:[%s3 + $0x20] sm:$0xff]
  %v309 = vld [vmem:[%s3 + $0x28] sm:$0xff]
  %v310 = vld [vmem:[%s3 + $0x30] sm:$0xff]
  %v311 = vld [vmem:[%s3 + $0x38] sm:$0xff]
  %v312 = vld [vmem:[%s3 + $0x40] sm:$0xff]
  %v313 = vld [vmem:[%s3 + $0x48] sm:$0xff]
  %v314 = vld [vmem:[%s3 + $0x50] sm:$0xff]
  %v315 = vld [vmem:[%s3 + $0x58] sm:$0xff]
  %v316 = vld [vmem:[%s3 + $0x60] sm:$0xff]
  %v317 = vld [vmem:[%s3 + $0x68] sm:$0xff]
  %v318 = vld [vmem:[%s3 + $0x70] sm:$0xff]
  %v319 = vld [vmem:[%s3 + $0x78] sm:$0xff]
  %vm320 = vcmask 523264
  %v322 = vsel %vm320, %v304, 0
  %v325 = vsel %vm320, %v305, 0
  %v328 = vsel %vm320, %v306, 0
  %v331 = vsel %vm320, %v307, 0
  %v334 = vsel %vm320, %v308, 0
  %v337 = vsel %vm320, %v309, 0
  %v340 = vsel %vm320, %v310, 0
  %v343 = vsel %vm320, %v311, 0
  %v346 = vsel %vm320, %v312, 0
  %v349 = vsel %vm320, %v313, 0
  %v352 = vsel %vm320, %v314, 0
  %v355 = vsel %vm320, %v315, 0
  %v358 = vsel %vm320, %v316, 0
  %v361 = vsel %vm320, %v317, 0
  %v364 = vsel %vm320, %v318, 0
  %v367 = vsel %vm320, %v319, 0
  %369 = vmatpush.msra.mxu0 0.0
  %370 = vmatpush.msra.mxu0 0.0
  %371 = vmatpush.msra.mxu0 0.0
  %372 = vmatpush.msra.mxu0 0.0
  %373 = vmatpush.msra.mxu0 0.0
  %374 = vmatpush.msra.mxu0 0.0
  %375 = vmatpush.msra.mxu0 0.0
  %376 = vmatpush.msra.mxu0 0.0
  %377 = vmatpush.msra.mxu0 %v300
  %378 = vmatpush.msra.mxu0 %v296
  %379 = vmatpush.msra.mxu0 %v292
  %380 = vmatpush.msra.mxu0 %v288
  %381 = vmatpush.msra.mxu0 %v284
  %382 = vmatpush.msra.mxu0 %v280
  %383 = vmatpush.msra.mxu0 %v276
  %384 = vmatpush.msra.mxu0 %v272
  %385 = vmatmul.f32.gmra.mxu0 %v322
  %v386 = vpop.f32.mrf.mxu0
  %v387 = vadd.f32 0.0, %v386
  %388 = vmatmul.f32.gmra.mxu0 %v325
  %v389 = vpop.f32.mrf.mxu0
  %v390 = vadd.f32 0.0, %v389
  %391 = vmatmul.f32.gmra.mxu0 %v328
  %v392 = vpop.f32.mrf.mxu0
  %v393 = vadd.f32 0.0, %v392
  %394 = vmatmul.f32.gmra.mxu0 %v331
  %v395 = vpop.f32.mrf.mxu0
  %v396 = vadd.f32 0.0, %v395
  %397 = vmatmul.f32.gmra.mxu0 %v334
  %v398 = vpop.f32.mrf.mxu0
  %v399 = vadd.f32 0.0, %v398
  %400 = vmatmul.f32.gmra.mxu0 %v337
  %v401 = vpop.f32.mrf.mxu0
  %v402 = vadd.f32 0.0, %v401
  %403 = vmatmul.f32.gmra.mxu0 %v340
  %v404 = vpop.f32.mrf.mxu0
  %v405 = vadd.f32 0.0, %v404
  %406 = vmatmul.f32.gmra.mxu0 %v343
  %v407 = vpop.f32.mrf.mxu0
  %v408 = vadd.f32 0.0, %v407
  %409 = vmatmul.f32.gmra.mxu0 %v346
  %v410 = vpop.f32.mrf.mxu0
  %v411 = vadd.f32 0.0, %v410
  %412 = vmatmul.f32.gmra.mxu0 %v349
  %v413 = vpop.f32.mrf.mxu0
  %v414 = vadd.f32 0.0, %v413
  %415 = vmatmul.f32.gmra.mxu0 %v352
  %v416 = vpop.f32.mrf.mxu0
  %v417 = vadd.f32 0.0, %v416
  %418 = vmatmul.f32.gmra.mxu0 %v355
  %v419 = vpop.f32.mrf.mxu0
  %v420 = vadd.f32 0.0, %v419
  %421 = vmatmul.f32.gmra.mxu0 %v358
  %v422 = vpop.f32.mrf.mxu0
  %v423 = vadd.f32 0.0, %v422
  %424 = vmatmul.f32.gmra.mxu0 %v361
  %v425 = vpop.f32.mrf.mxu0
  %v426 = vadd.f32 0.0, %v425
  %427 = vmatmul.f32.gmra.mxu0 %v364
  %v428 = vpop.f32.mrf.mxu0
  %v429 = vadd.f32 0.0, %v428
  %430 = vmatmul.f32.gmra.mxu0 %v367
  %v431 = vpop.f32.mrf.mxu0
  %v432 = vadd.f32 0.0, %v431
  %433 = vdwg.mxu0
  %434 = vmatpush.msra.mxu0 0.0
  %435 = vmatpush.msra.mxu0 0.0
  %436 = vmatpush.msra.mxu0 0.0
  %437 = vmatpush.msra.mxu0 0.0
  %438 = vmatpush.msra.mxu0 0.0
  %439 = vmatpush.msra.mxu0 0.0
  %440 = vmatpush.msra.mxu0 0.0
  %441 = vmatpush.msra.mxu0 0.0
  %442 = vmatpush.msra.mxu0 %v301
  %443 = vmatpush.msra.mxu0 %v297
  %444 = vmatpush.msra.mxu0 %v293
  %445 = vmatpush.msra.mxu0 %v289
  %446 = vmatpush.msra.mxu0 %v285
  %447 = vmatpush.msra.mxu0 %v281
  %448 = vmatpush.msra.mxu0 %v277
  %449 = vmatpush.msra.mxu0 %v273
  %450 = vmatmul.f32.gmra.mxu0 %v322
  %v451 = vpop.f32.mrf.mxu0
  %v452 = vadd.f32 0.0, %v451
  %453 = vmatmul.f32.gmra.mxu0 %v325
  %v454 = vpop.f32.mrf.mxu0
  %v455 = vadd.f32 0.0, %v454
  %456 = vmatmul.f32.gmra.mxu0 %v328
  %v457 = vpop.f32.mrf.mxu0
  %v458 = vadd.f32 0.0, %v457
  %459 = vmatmul.f32.gmra.mxu0 %v331
  %v460 = vpop.f32.mrf.mxu0
  %v461 = vadd.f32 0.0, %v460
  %462 = vmatmul.f32.gmra.mxu0 %v334
  %v463 = vpop.f32.mrf.mxu0
  %v464 = vadd.f32 0.0, %v463
  %465 = vmatmul.f32.gmra.mxu0 %v337
  %v466 = vpop.f32.mrf.mxu0
  %v467 = vadd.f32 0.0, %v466
  %468 = vmatmul.f32.gmra.mxu0 %v340
  %v469 = vpop.f32.mrf.mxu0
  %v470 = vadd.f32 0.0, %v469
  %471 = vmatmul.f32.gmra.mxu0 %v343
  %v472 = vpop.f32.mrf.mxu0
  %v473 = vadd.f32 0.0, %v472
  %474 = vmatmul.f32.gmra.mxu0 %v346
  %v475 = vpop.f32.mrf.mxu0
  %v476 = vadd.f32 0.0, %v475
  %477 = vmatmul.f32.gmra.mxu0 %v349
  %v478 = vpop.f32.mrf.mxu0
  %v479 = vadd.f32 0.0, %v478
  %480 = vmatmul.f32.gmra.mxu0 %v352
  %v481 = vpop.f32.mrf.mxu0
  %v482 = vadd.f32 0.0, %v481
  %483 = vmatmul.f32.gmra.mxu0 %v355
  %v484 = vpop.f32.mrf.mxu0
  %v485 = vadd.f32 0.0, %v484
  %486 = vmatmul.f32.gmra.mxu0 %v358
  %v487 = vpop.f32.mrf.mxu0
  %v488 = vadd.f32 0.0, %v487
  %489 = vmatmul.f32.gmra.mxu0 %v361
  %v490 = vpop.f32.mrf.mxu0
  %v491 = vadd.f32 0.0, %v490
  %492 = vmatmul.f32.gmra.mxu0 %v364
  %v493 = vpop.f32.mrf.mxu0
  %v494 = vadd.f32 0.0, %v493
  %495 = vmatmul.f32.gmra.mxu0 %v367
  %v496 = vpop.f32.mrf.mxu0
  %v497 = vadd.f32 0.0, %v496
  %498 = vdwg.mxu0
  %499 = vmatpush.msra.mxu0 0.0
  %500 = vmatpush.msra.mxu0 0.0
  %501 = vmatpush.msra.mxu0 0.0
  %502 = vmatpush.msra.mxu0 0.0
  %503 = vmatpush.msra.mxu0 0.0
  %504 = vmatpush.msra.mxu0 0.0
  %505 = vmatpush.msra.mxu0 0.0
  %506 = vmatpush.msra.mxu0 0.0
  %507 = vmatpush.msra.mxu0 %v302
  %508 = vmatpush.msra.mxu0 %v298
  %509 = vmatpush.msra.mxu0 %v294
  %510 = vmatpush.msra.mxu0 %v290
  %511 = vmatpush.msra.mxu0 %v286
  %512 = vmatpush.msra.mxu0 %v282
  %513 = vmatpush.msra.mxu0 %v278
  %514 = vmatpush.msra.mxu0 %v274
  %515 = vmatmul.f32.gmra.mxu0 %v322
  %v516 = vpop.f32.mrf.mxu0
  %v517 = vadd.f32 0.0, %v516
  %518 = vmatmul.f32.gmra.mxu0 %v325
  %v519 = vpop.f32.mrf.mxu0
  %v520 = vadd.f32 0.0, %v519
  %521 = vmatmul.f32.gmra.mxu0 %v328
  %v522 = vpop.f32.mrf.mxu0
  %v523 = vadd.f32 0.0, %v522
  %524 = vmatmul.f32.gmra.mxu0 %v331
  %v525 = vpop.f32.mrf.mxu0
  %v526 = vadd.f32 0.0, %v525
  %527 = vmatmul.f32.gmra.mxu0 %v334
  %v528 = vpop.f32.mrf.mxu0
  %v529 = vadd.f32 0.0, %v528
  %530 = vmatmul.f32.gmra.mxu0 %v337
  %v531 = vpop.f32.mrf.mxu0
  %v532 = vadd.f32 0.0, %v531
  %533 = vmatmul.f32.gmra.mxu0 %v340
  %v534 = vpop.f32.mrf.mxu0
  %v535 = vadd.f32 0.0, %v534
  %536 = vmatmul.f32.gmra.mxu0 %v343
  %v537 = vpop.f32.mrf.mxu0
  %v538 = vadd.f32 0.0, %v537
  %539 = vmatmul.f32.gmra.mxu0 %v346
  %v540 = vpop.f32.mrf.mxu0
  %v541 = vadd.f32 0.0, %v540
  %542 = vmatmul.f32.gmra.mxu0 %v349
  %v543 = vpop.f32.mrf.mxu0
  %v544 = vadd.f32 0.0, %v543
  %545 = vmatmul.f32.gmra.mxu0 %v352
  %v546 = vpop.f32.mrf.mxu0
  %v547 = vadd.f32 0.0, %v546
  %548 = vmatmul.f32.gmra.mxu0 %v355
  %v549 = vpop.f32.mrf.mxu0
  %v550 = vadd.f32 0.0, %v549
  %551 = vmatmul.f32.gmra.mxu0 %v358
  %v552 = vpop.f32.mrf.mxu0
  %v553 = vadd.f32 0.0, %v552
  %554 = vmatmul.f32.gmra.mxu0 %v361
  %v555 = vpop.f32.mrf.mxu0
  %v556 = vadd.f32 0.0, %v555
  %557 = vmatmul.f32.gmra.mxu0 %v364
  %v558 = vpop.f32.mrf.mxu0
  %v559 = vadd.f32 0.0, %v558
  %560 = vmatmul.f32.gmra.mxu0 %v367
  %v561 = vpop.f32.mrf.mxu0
  %v562 = vadd.f32 0.0, %v561
  %563 = vdwg.mxu0
  %564 = vmatpush.msra.mxu0 0.0
  %565 = vmatpush.msra.mxu0 0.0
  %566 = vmatpush.msra.mxu0 0.0
  %567 = vmatpush.msra.mxu0 0.0
  %568 = vmatpush.msra.mxu0 0.0
  %569 = vmatpush.msra.mxu0 0.0
  %570 = vmatpush.msra.mxu0 0.0
  %571 = vmatpush.msra.mxu0 0.0
  %572 = vmatpush.msra.mxu0 %v303
  %573 = vmatpush.msra.mxu0 %v299
  %574 = vmatpush.msra.mxu0 %v295
  %575 = vmatpush.msra.mxu0 %v291
  %576 = vmatpush.msra.mxu0 %v287
  %577 = vmatpush.msra.mxu0 %v283
  %578 = vmatpush.msra.mxu0 %v279
  %579 = vmatpush.msra.mxu0 %v275
  %580 = vmatmul.f32.gmra.mxu0 %v322
  %v581 = vpop.f32.mrf.mxu0
  %v582 = vadd.f32 0.0, %v581
  %583 = vmatmul.f32.gmra.mxu0 %v325
  %v584 = vpop.f32.mrf.mxu0
  %v585 = vadd.f32 0.0, %v584
  %586 = vmatmul.f32.gmra.mxu0 %v328
  %v587 = vpop.f32.mrf.mxu0
  %v588 = vadd.f32 0.0, %v587
  %589 = vmatmul.f32.gmra.mxu0 %v331
  %v590 = vpop.f32.mrf.mxu0
  %v591 = vadd.f32 0.0, %v590
  %592 = vmatmul.f32.gmra.mxu0 %v334
  %v593 = vpop.f32.mrf.mxu0
  %v594 = vadd.f32 0.0, %v593
  %595 = vmatmul.f32.gmra.mxu0 %v337
  %v596 = vpop.f32.mrf.mxu0
  %v597 = vadd.f32 0.0, %v596
  %598 = vmatmul.f32.gmra.mxu0 %v340
  %v599 = vpop.f32.mrf.mxu0
  %v600 = vadd.f32 0.0, %v599
  %601 = vmatmul.f32.gmra.mxu0 %v343
  %v602 = vpop.f32.mrf.mxu0
  %v603 = vadd.f32 0.0, %v602
  %604 = vmatmul.f32.gmra.mxu0 %v346
  %v605 = vpop.f32.mrf.mxu0
  %v606 = vadd.f32 0.0, %v605
  %607 = vmatmul.f32.gmra.mxu0 %v349
  %v608 = vpop.f32.mrf.mxu0
  %v609 = vadd.f32 0.0, %v608
  %610 = vmatmul.f32.gmra.mxu0 %v352
  %v611 = vpop.f32.mrf.mxu0
  %v612 = vadd.f32 0.0, %v611
  %613 = vmatmul.f32.gmra.mxu0 %v355
  %v614 = vpop.f32.mrf.mxu0
  %v615 = vadd.f32 0.0, %v614
  %616 = vmatmul.f32.gmra.mxu0 %v358
  %v617 = vpop.f32.mrf.mxu0
  %v618 = vadd.f32 0.0, %v617
  %619 = vmatmul.f32.gmra.mxu0 %v361
  %v620 = vpop.f32.mrf.mxu0
  %v621 = vadd.f32 0.0, %v620
  %622 = vmatmul.f32.gmra.mxu0 %v364
  %v623 = vpop.f32.mrf.mxu0
  %v624 = vadd.f32 0.0, %v623
  %625 = vmatmul.f32.gmra.mxu0 %v367
  %v626 = vpop.f32.mrf.mxu0
  %v627 = vadd.f32 0.0, %v626
  %628 = vdwg.mxu0
  %v629 = vlaneseq
  %v630 = vand.u32 %v629, 127
  %v631 = vadd.s32 %v630, 128
  %v632 = vadd.s32 %v630, 256
  %v633 = vadd.s32 %v630, 384
  %s634 = smul.u32 0, 512
  %v635 = vstv %s634
  %v636 = vadd.s32 %v635, %v630
  %v637 = vadd.s32 %v635, %v631
  %v638 = vadd.s32 %v635, %v632
  %v639 = vadd.s32 %v635, %v633
  %vm640 = vcmp.lt.s32.totalorder %v636, 512
  %vm641 = vcmp.lt.s32.totalorder %v637, 512
  %vm642 = vcmp.lt.s32.totalorder %v638, 512
  %vm643 = vcmp.lt.s32.totalorder %v639, 512
  %v644 = vsel %vm640, 1, 0
  %v645 = vsel %vm641, 1, 0
  %v646 = vsel %vm642, 1, 0
  %v647 = vsel %vm643, 1, 0
  %vm648 = vcmp.eq.s32.totalorder %v644, 1
  %vm649 = vcmp.eq.s32.totalorder %v645, 1
  %vm650 = vcmp.eq.s32.totalorder %v646, 1
  %vm651 = vcmp.eq.s32.totalorder %v647, 1
  %v652 = vsel %vm648, %v387, 0.0
  %v653 = vsel %vm649, %v452, 0.0
  %v654 = vsel %vm650, %v517, 0.0
  %v655 = vsel %vm651, %v582, 0.0
  %v656 = vsel %vm648, %v390, 0.0
  %v657 = vsel %vm649, %v455, 0.0
  %v658 = vsel %vm650, %v520, 0.0
  %v659 = vsel %vm651, %v585, 0.0
  %v660 = vsel %vm648, %v393, 0.0
  %v661 = vsel %vm649, %v458, 0.0
  %v662 = vsel %vm650, %v523, 0.0
  %v663 = vsel %vm651, %v588, 0.0
  %v664 = vsel %vm648, %v396, 0.0
  %v665 = vsel %vm649, %v461, 0.0
  %v666 = vsel %vm650, %v526, 0.0
  %v667 = vsel %vm651, %v591, 0.0
  %v668 = vsel %vm648, %v399, 0.0
  %v669 = vsel %vm649, %v464, 0.0
  %v670 = vsel %vm650, %v529, 0.0
  %v671 = vsel %vm651, %v594, 0.0
  %v672 = vsel %vm648, %v402, 0.0
  %v673 = vsel %vm649, %v467, 0.0
  %v674 = vsel %vm650, %v532, 0.0
  %v675 = vsel %vm651, %v597, 0.0
  %v676 = vsel %vm648, %v405, 0.0
  %v677 = vsel %vm649, %v470, 0.0
  %v678 = vsel %vm650, %v535, 0.0
  %v679 = vsel %vm651, %v600, 0.0
  %v680 = vsel %vm648, %v408, 0.0
  %v681 = vsel %vm649, %v473, 0.0
  %v682 = vsel %vm650, %v538, 0.0
  %v683 = vsel %vm651, %v603, 0.0
  %v684 = vsel %vm648, %v411, 0.0
  %v685 = vsel %vm649, %v476, 0.0
  %v686 = vsel %vm650, %v541, 0.0
  %v687 = vsel %vm651, %v606, 0.0
  %v688 = vsel %vm648, %v414, 0.0
  %v689 = vsel %vm649, %v479, 0.0
  %v690 = vsel %vm650, %v544, 0.0
  %v691 = vsel %vm651, %v609, 0.0
  %v692 = vsel %vm648, %v417, 0.0
  %v693 = vsel %vm649, %v482, 0.0
  %v694 = vsel %vm650, %v547, 0.0
  %v695 = vsel %vm651, %v612, 0.0
  %v696 = vsel %vm648, %v420, 0.0
  %v697 = vsel %vm649, %v485, 0.0
  %v698 = vsel %vm650, %v550, 0.0
  %v699 = vsel %vm651, %v615, 0.0
  %v700 = vsel %vm648, %v423, 0.0
  %v701 = vsel %vm649, %v488, 0.0
  %v702 = vsel %vm650, %v553, 0.0
  %v703 = vsel %vm651, %v618, 0.0
  %v704 = vsel %vm648, %v426, 0.0
  %v705 = vsel %vm649, %v491, 0.0
  %v706 = vsel %vm650, %v556, 0.0
  %v707 = vsel %vm651, %v621, 0.0
  %v708 = vsel %vm648, %v429, 0.0
  %v709 = vsel %vm649, %v494, 0.0
  %v710 = vsel %vm650, %v559, 0.0
  %v711 = vsel %vm651, %v624, 0.0
  %v712 = vsel %vm648, %v432, 0.0
  %v713 = vsel %vm649, %v497, 0.0
  %v714 = vsel %vm650, %v562, 0.0
  %v715 = vsel %vm651, %v627, 0.0
  %v716 = vld [vmem:[%s4] sm:$0xff]
  %v717 = vld [vmem:[%s4 + $0x8] sm:$0xff]
  %v718 = vld [vmem:[%s4 + $0x10] sm:$0xff]
  %v719 = vld [vmem:[%s4 + $0x18] sm:$0xff]
  %v720 = vld [vmem:[%s4 + $0x20] sm:$0xff]
  %v721 = vld [vmem:[%s4 + $0x28] sm:$0xff]
  %v722 = vld [vmem:[%s4 + $0x30] sm:$0xff]
  %v723 = vld [vmem:[%s4 + $0x38] sm:$0xff]
  %v724 = vld [vmem:[%s4 + $0x40] sm:$0xff]
  %v725 = vld [vmem:[%s4 + $0x48] sm:$0xff]
  %v726 = vld [vmem:[%s4 + $0x50] sm:$0xff]
  %v727 = vld [vmem:[%s4 + $0x58] sm:$0xff]
  %v728 = vld [vmem:[%s4 + $0x60] sm:$0xff]
  %v729 = vld [vmem:[%s4 + $0x68] sm:$0xff]
  %v730 = vld [vmem:[%s4 + $0x70] sm:$0xff]
  %v731 = vld [vmem:[%s4 + $0x78] sm:$0xff]
  %v732 = vadd.f32 %v652, %v653
  %v733 = vadd.f32 %v732, %v654
  %v734 = vadd.f32 %v733, %v655
  %735 = vadd.xlane.f32.xlu0 %v734
  %v736 = vpop.xlane.xlu0 %735
  %v737 = vadd.f32 %v656, %v657
  %v738 = vadd.f32 %v737, %v658
  %v739 = vadd.f32 %v738, %v659
  %740 = vadd.xlane.f32.xlu0 %v739
  %v741 = vpop.xlane.xlu0 %740
  %v742 = vadd.f32 %v660, %v661
  %v743 = vadd.f32 %v742, %v662
  %v744 = vadd.f32 %v743, %v663
  %745 = vadd.xlane.f32.xlu0 %v744
  %v746 = vpop.xlane.xlu0 %745
  %v747 = vadd.f32 %v664, %v665
  %v748 = vadd.f32 %v747, %v666
  %v749 = vadd.f32 %v748, %v667
  %750 = vadd.xlane.f32.xlu0 %v749
  %v751 = vpop.xlane.xlu0 %750
  %v752 = vadd.f32 %v668, %v669
  %v753 = vadd.f32 %v752, %v670
  %v754 = vadd.f32 %v753, %v671
  %755 = vadd.xlane.f32.xlu0 %v754
  %v756 = vpop.xlane.xlu0 %755
  %v757 = vadd.f32 %v672, %v673
  %v758 = vadd.f32 %v757, %v674
  %v759 = vadd.f32 %v758, %v675
  %760 = vadd.xlane.f32.xlu0 %v759
  %v761 = vpop.xlane.xlu0 %760
  %v762 = vadd.f32 %v676, %v677
  %v763 = vadd.f32 %v762, %v678
  %v764 = vadd.f32 %v763, %v679
  %765 = vadd.xlane.f32.xlu0 %v764
  %v766 = vpop.xlane.xlu0 %765
  %v767 = vadd.f32 %v680, %v681
  %v768 = vadd.f32 %v767, %v682
  %v769 = vadd.f32 %v768, %v683
  %770 = vadd.xlane.f32.xlu0 %v769
  %v771 = vpop.xlane.xlu0 %770
  %v772 = vadd.f32 %v684, %v685
  %v773 = vadd.f32 %v772, %v686
  %v774 = vadd.f32 %v773, %v687
  %775 = vadd.xlane.f32.xlu0 %v774
  %v776 = vpop.xlane.xlu0 %775
  %v777 = vadd.f32 %v688, %v689
  %v778 = vadd.f32 %v777, %v690
  %v779 = vadd.f32 %v778, %v691
  %780 = vadd.xlane.f32.xlu0 %v779
  %v781 = vpop.xlane.xlu0 %780
  %v782 = vadd.f32 %v692, %v693
  %v783 = vadd.f32 %v782, %v694
  %v784 = vadd.f32 %v783, %v695
  %785 = vadd.xlane.f32.xlu0 %v784
  %v786 = vpop.xlane.xlu0 %785
  %v787 = vadd.f32 %v696, %v697
  %v788 = vadd.f32 %v787, %v698
  %v789 = vadd.f32 %v788, %v699
  %790 = vadd.xlane.f32.xlu0 %v789
  %v791 = vpop.xlane.xlu0 %790
  %v792 = vadd.f32 %v700, %v701
  %v793 = vadd.f32 %v792, %v702
  %v794 = vadd.f32 %v793, %v703
  %795 = vadd.xlane.f32.xlu0 %v794
  %v796 = vpop.xlane.xlu0 %795
  %v797 = vadd.f32 %v704, %v705
  %v798 = vadd.f32 %v797, %v706
  %v799 = vadd.f32 %v798, %v707
  %800 = vadd.xlane.f32.xlu0 %v799
  %v801 = vpop.xlane.xlu0 %800
  %v802 = vadd.f32 %v708, %v709
  %v803 = vadd.f32 %v802, %v710
  %v804 = vadd.f32 %v803, %v711
  %805 = vadd.xlane.f32.xlu0 %v804
  %v806 = vpop.xlane.xlu0 %805
  %v807 = vadd.f32 %v712, %v713
  %v808 = vadd.f32 %v807, %v714
  %v809 = vadd.f32 %v808, %v715
  %810 = vadd.xlane.f32.xlu0 %v809
  %v811 = vpop.xlane.xlu0 %810
  %v812 = vadd.f32 %v716, %v736
  %v813 = vadd.f32 %v717, %v741
  %v814 = vadd.f32 %v718, %v746
  %v815 = vadd.f32 %v719, %v751
  %v816 = vadd.f32 %v720, %v756
  %v817 = vadd.f32 %v721, %v761
  %v818 = vadd.f32 %v722, %v766
  %v819 = vadd.f32 %v723, %v771
  %v820 = vadd.f32 %v724, %v776
  %v821 = vadd.f32 %v725, %v781
  %v822 = vadd.f32 %v726, %v786
  %v823 = vadd.f32 %v727, %v791
  %v824 = vadd.f32 %v728, %v796
  %v825 = vadd.f32 %v729, %v801
  %v826 = vadd.f32 %v730, %v806
  %v827 = vadd.f32 %v731, %v811
  %vm828 = vcmask 7168
  %829 = vst.msk [vmem:[%s4] sm:$0xff] %vm828, %v812
  %830 = vst.msk [vmem:[%s4 + $0x8] sm:$0xff] %vm828, %v813
  %831 = vst.msk [vmem:[%s4 + $0x10] sm:$0xff] %vm828, %v814
  %832 = vst.msk [vmem:[%s4 + $0x18] sm:$0xff] %vm828, %v815
  %833 = vst.msk [vmem:[%s4 + $0x20] sm:$0xff] %vm828, %v816
  %834 = vst.msk [vmem:[%s4 + $0x28] sm:$0xff] %vm828, %v817
  %835 = vst.msk [vmem:[%s4 + $0x30] sm:$0xff] %vm828, %v818
  %836 = vst.msk [vmem:[%s4 + $0x38] sm:$0xff] %vm828, %v819
  %837 = vst.msk [vmem:[%s4 + $0x40] sm:$0xff] %vm828, %v820
  %838 = vst.msk [vmem:[%s4 + $0x48] sm:$0xff] %vm828, %v821
  %839 = vst.msk [vmem:[%s4 + $0x50] sm:$0xff] %vm828, %v822
  %840 = vst.msk [vmem:[%s4 + $0x58] sm:$0xff] %vm828, %v823
  %841 = vst.msk [vmem:[%s4 + $0x60] sm:$0xff] %vm828, %v824
  %842 = vst.msk [vmem:[%s4 + $0x68] sm:$0xff] %vm828, %v825
  %843 = vst.msk [vmem:[%s4 + $0x70] sm:$0xff] %vm828, %v826
  %844 = vst.msk [vmem:[%s4 + $0x78] sm:$0xff] %vm828, %v827
  %v845 = vld [vmem:[%s4] sm:$0xff]
  %v846 = vld [vmem:[%s4 + $0x8] sm:$0xff]
  %v847 = vld [vmem:[%s4 + $0x10] sm:$0xff]
  %v848 = vld [vmem:[%s4 + $0x18] sm:$0xff]
  %v849 = vld [vmem:[%s4 + $0x20] sm:$0xff]
  %v850 = vld [vmem:[%s4 + $0x28] sm:$0xff]
  %v851 = vld [vmem:[%s4 + $0x30] sm:$0xff]
  %v852 = vld [vmem:[%s4 + $0x38] sm:$0xff]
  %v853 = vld [vmem:[%s4 + $0x40] sm:$0xff]
  %v854 = vld [vmem:[%s4 + $0x48] sm:$0xff]
  %v855 = vld [vmem:[%s4 + $0x50] sm:$0xff]
  %v856 = vld [vmem:[%s4 + $0x58] sm:$0xff]
  %v857 = vld [vmem:[%s4 + $0x60] sm:$0xff]
  %v858 = vld [vmem:[%s4 + $0x68] sm:$0xff]
  %v859 = vld [vmem:[%s4 + $0x70] sm:$0xff]
  %v860 = vld [vmem:[%s4 + $0x78] sm:$0xff]
  %v861 = vmul.f32 %v652, %v652
  %v862 = vmul.f32 %v653, %v653
  %v863 = vmul.f32 %v654, %v654
  %v864 = vmul.f32 %v655, %v655
  %v865 = vmul.f32 %v656, %v656
  %v866 = vmul.f32 %v657, %v657
  %v867 = vmul.f32 %v658, %v658
  %v868 = vmul.f32 %v659, %v659
  %v869 = vmul.f32 %v660, %v660
  %v870 = vmul.f32 %v661, %v661
  %v871 = vmul.f32 %v662, %v662
  %v872 = vmul.f32 %v663, %v663
  %v873 = vmul.f32 %v664, %v664
  %v874 = vmul.f32 %v665, %v665
  %v875 = vmul.f32 %v666, %v666
  %v876 = vmul.f32 %v667, %v667
  %v877 = vmul.f32 %v668, %v668
  %v878 = vmul.f32 %v669, %v669
  %v879 = vmul.f32 %v670, %v670
  %v880 = vmul.f32 %v671, %v671
  %v881 = vmul.f32 %v672, %v672
  %v882 = vmul.f32 %v673, %v673
  %v883 = vmul.f32 %v674, %v674
  %v884 = vmul.f32 %v675, %v675
  %v885 = vmul.f32 %v676, %v676
  %v886 = vmul.f32 %v677, %v677
  %v887 = vmul.f32 %v678, %v678
  %v888 = vmul.f32 %v679, %v679
  %v889 = vmul.f32 %v680, %v680
  %v890 = vmul.f32 %v681, %v681
  %v891 = vmul.f32 %v682, %v682
  %v892 = vmul.f32 %v683, %v683
  %v893 = vmul.f32 %v684, %v684
  %v894 = vmul.f32 %v685, %v685
  %v895 = vmul.f32 %v686, %v686
  %v896 = vmul.f32 %v687, %v687
  %v897 = vmul.f32 %v688, %v688
  %v898 = vmul.f32 %v689, %v689
  %v899 = vmul.f32 %v690, %v690
  %v900 = vmul.f32 %v691, %v691
  %v901 = vmul.f32 %v692, %v692
  %v902 = vmul.f32 %v693, %v693
  %v903 = vmul.f32 %v694, %v694
  %v904 = vmul.f32 %v695, %v695
  %v905 = vmul.f32 %v696, %v696
  %v906 = vmul.f32 %v697, %v697
  %v907 = vmul.f32 %v698, %v698
  %v908 = vmul.f32 %v699, %v699
  %v909 = vmul.f32 %v700, %v700
  %v910 = vmul.f32 %v701, %v701
  %v911 = vmul.f32 %v702, %v702
  %v912 = vmul.f32 %v703, %v703
  %v913 = vmul.f32 %v704, %v704
  %v914 = vmul.f32 %v705, %v705
  %v915 = vmul.f32 %v706, %v706
  %v916 = vmul.f32 %v707, %v707
  %v917 = vmul.f32 %v708, %v708
  %v918 = vmul.f32 %v709, %v709
  %v919 = vmul.f32 %v710, %v710
  %v920 = vmul.f32 %v711, %v711
  %v921 = vmul.f32 %v712, %v712
  %v922 = vmul.f32 %v713, %v713
  %v923 = vmul.f32 %v714, %v714
  %v924 = vmul.f32 %v715, %v715
  %v925 = vadd.f32 %v861, %v862
  %v926 = vadd.f32 %v925, %v863
  %v927 = vadd.f32 %v926, %v864
  %928 = vadd.xlane.f32.xlu0 %v927
  %v929 = vpop.xlane.xlu0 %928
  %v930 = vadd.f32 %v865, %v866
  %v931 = vadd.f32 %v930, %v867
  %v932 = vadd.f32 %v931, %v868
  %933 = vadd.xlane.f32.xlu0 %v932
  %v934 = vpop.xlane.xlu0 %933
  %v935 = vadd.f32 %v869, %v870
  %v936 = vadd.f32 %v935, %v871
  %v937 = vadd.f32 %v936, %v872
  %938 = vadd.xlane.f32.xlu0 %v937
  %v939 = vpop.xlane.xlu0 %938
  %v940 = vadd.f32 %v873, %v874
  %v941 = vadd.f32 %v940, %v875
  %v942 = vadd.f32 %v941, %v876
  %943 = vadd.xlane.f32.xlu0 %v942
  %v944 = vpop.xlane.xlu0 %943
  %v945 = vadd.f32 %v877, %v878
  %v946 = vadd.f32 %v945, %v879
  %v947 = vadd.f32 %v946, %v880
  %948 = vadd.xlane.f32.xlu0 %v947
  %v949 = vpop.xlane.xlu0 %948
  %v950 = vadd.f32 %v881, %v882
  %v951 = vadd.f32 %v950, %v883
  %v952 = vadd.f32 %v951, %v884
  %953 = vadd.xlane.f32.xlu0 %v952
  %v954 = vpop.xlane.xlu0 %953
  %v955 = vadd.f32 %v885, %v886
  %v956 = vadd.f32 %v955, %v887
  %v957 = vadd.f32 %v956, %v888
  %958 = vadd.xlane.f32.xlu0 %v957
  %v959 = vpop.xlane.xlu0 %958
  %v960 = vadd.f32 %v889, %v890
  %v961 = vadd.f32 %v960, %v891
  %v962 = vadd.f32 %v961, %v892
  %963 = vadd.xlane.f32.xlu0 %v962
  %v964 = vpop.xlane.xlu0 %963
  %v965 = vadd.f32 %v893, %v894
  %v966 = vadd.f32 %v965, %v895
  %v967 = vadd.f32 %v966, %v896
  %968 = vadd.xlane.f32.xlu0 %v967
  %v969 = vpop.xlane.xlu0 %968
  %v970 = vadd.f32 %v897, %v898
  %v971 = vadd.f32 %v970, %v899
  %v972 = vadd.f32 %v971, %v900
  %973 = vadd.xlane.f32.xlu0 %v972
  %v974 = vpop.xlane.xlu0 %973
  %v975 = vadd.f32 %v901, %v902
  %v976 = vadd.f32 %v975, %v903
  %v977 = vadd.f32 %v976, %v904
  %978 = vadd.xlane.f32.xlu0 %v977
  %v979 = vpop.xlane.xlu0 %978
  %v980 = vadd.f32 %v905, %v906
  %v981 = vadd.f32 %v980, %v907
  %v982 = vadd.f32 %v981, %v908
  %983 = vadd.xlane.f32.xlu0 %v982
  %v984 = vpop.xlane.xlu0 %983
  %v985 = vadd.f32 %v909, %v910
  %v986 = vadd.f32 %v985, %v911
  %v987 = vadd.f32 %v986, %v912
  %988 = vadd.xlane.f32.xlu0 %v987
  %v989 = vpop.xlane.xlu0 %988
  %v990 = vadd.f32 %v913, %v914
  %v991 = vadd.f32 %v990, %v915
  %v992 = vadd.f32 %v991, %v916
  %993 = vadd.xlane.f32.xlu0 %v992
  %v994 = vpop.xlane.xlu0 %993
  %v995 = vadd.f32 %v917, %v918
  %v996 = vadd.f32 %v995, %v919
  %v997 = vadd.f32 %v996, %v920
  %998 = vadd.xlane.f32.xlu0 %v997
  %v999 = vpop.xlane.xlu0 %998
  %v1000 = vadd.f32 %v921, %v922
  %v1001 = vadd.f32 %v1000, %v923
  %v1002 = vadd.f32 %v1001, %v924
  %1003 = vadd.xlane.f32.xlu0 %v1002
  %v1004 = vpop.xlane.xlu0 %1003
  %v1005 = vadd.f32 %v845, %v929
  %v1006 = vadd.f32 %v846, %v934
  %v1007 = vadd.f32 %v847, %v939
  %v1008 = vadd.f32 %v848, %v944
  %v1009 = vadd.f32 %v849, %v949
  %v1010 = vadd.f32 %v850, %v954
  %v1011 = vadd.f32 %v851, %v959
  %v1012 = vadd.f32 %v852, %v964
  %v1013 = vadd.f32 %v853, %v969
  %v1014 = vadd.f32 %v854, %v974
  %v1015 = vadd.f32 %v855, %v979
  %v1016 = vadd.f32 %v856, %v984
  %v1017 = vadd.f32 %v857, %v989
  %v1018 = vadd.f32 %v858, %v994
  %v1019 = vadd.f32 %v859, %v999
  %v1020 = vadd.f32 %v860, %v1004
  %vm1021 = vcmask 15368
  %1022 = vst.msk [vmem:[%s4] sm:$0xff] %vm1021, %v1005
  %1023 = vst.msk [vmem:[%s4 + $0x8] sm:$0xff] %vm1021, %v1006
  %1024 = vst.msk [vmem:[%s4 + $0x10] sm:$0xff] %vm1021, %v1007
  %1025 = vst.msk [vmem:[%s4 + $0x18] sm:$0xff] %vm1021, %v1008
  %1026 = vst.msk [vmem:[%s4 + $0x20] sm:$0xff] %vm1021, %v1009
  %1027 = vst.msk [vmem:[%s4 + $0x28] sm:$0xff] %vm1021, %v1010
  %1028 = vst.msk [vmem:[%s4 + $0x30] sm:$0xff] %vm1021, %v1011
  %1029 = vst.msk [vmem:[%s4 + $0x38] sm:$0xff] %vm1021, %v1012
  %1030 = vst.msk [vmem:[%s4 + $0x40] sm:$0xff] %vm1021, %v1013
  %1031 = vst.msk [vmem:[%s4 + $0x48] sm:$0xff] %vm1021, %v1014
  %1032 = vst.msk [vmem:[%s4 + $0x50] sm:$0xff] %vm1021, %v1015
  %1033 = vst.msk [vmem:[%s4 + $0x58] sm:$0xff] %vm1021, %v1016
  %1034 = vst.msk [vmem:[%s4 + $0x60] sm:$0xff] %vm1021, %v1017
  %1035 = vst.msk [vmem:[%s4 + $0x68] sm:$0xff] %vm1021, %v1018
  %1036 = vst.msk [vmem:[%s4 + $0x70] sm:$0xff] %vm1021, %v1019
  %1037 = vst.msk [vmem:[%s4 + $0x78] sm:$0xff] %vm1021, %v1020
  // Predicated region
  $region22: #{tpu_custom_call.1} parent=0 // pred_check
    _
  $region23: #{tpu_custom_call.1} parent=0 // pred_check_branch
    %1039 = sbr.rel (0) target = $region25
  $region24: #{tpu_custom_call.1} parent=0 // pred_region
    _
  $region25: #{tpu_custom_call.1} parent=0 // pred_fallthru
    _
  // Predicated region
  $region26: #{tpu_custom_call.1} parent=0 // pred_check
    _
  $region27: #{tpu_custom_call.1} parent=0 // pred_check_branch
    %1041 = sbr.rel (0) target = $region29
  $region28: #{tpu_custom_call.1} parent=0 // pred_region
    _
  $region29: #{tpu_custom_call.1} parent=0 // pred_fallthru
    _

</llo_original>
